<compile_context>
chip_gen: v7x
topology: tpu7x:2x2x1
jax: 0.10.0
libtpu: 0.0.40
codegen_flags: <defaults>
</compile_context>

<pallas_src>
import jax
import jax.numpy as jnp
from jax.experimental import pallas as pl
from jax.experimental.pallas import tpu as pltpu


_LANE = 128            # lane width (last-dim alignment)
_MAX_SEQ_TILE = 512    # seq tile, multiple of 128 (~85% of HBM roofline for copies)
_MAX_BATCH_TILE = 256  # batch tile, multiple of 8/16/32 (any dtype packing)


def _copy_kernel(ts_ref, out_ref):
    # Tiled path: the ':-1' slice is expressed entirely in the grid /
    # BlockSpecs, so every store is a full-width unmasked vst (only the single
    # trailing remainder tile is masked by Pallas automatically).
    out_ref[...] = ts_ref[...]


def _slice_last_kernel(ts_ref, out_ref):
    # Narrow-seq fallback (T-1 < 128): whole seq axis in one block, slice
    # in-kernel.  Block shapes equal the full array dims, so layout is legal.
    out_ref[...] = ts_ref[:, :-1]


def _slice_timestamp_pallas(timestamp):
    """timestamp[:, :-1] as a tiled, pipelined Pallas copy."""
    B, T = timestamp.shape
    Tout = T - 1

    # Batch tile: full dim when small (always a legal block shape), otherwise
    # a 256-row tile (multiple of 8/16/32 -> whole vregs for any dtype).
    bB = B if B <= _MAX_BATCH_TILE else _MAX_BATCH_TILE
    grid_b = pl.cdiv(B, bB)

    if Tout >= _LANE:
        # Lane-aligned seq tile (multiple of 128, capped at 512).
        # Worst-case VMEM: 2 arrays x 2 buffers x 256x512x4B = 2 MiB, well
        # under every chip's scoped-VMEM default.
        bT = min(_MAX_SEQ_TILE, (Tout // _LANE) * _LANE)
        grid_t = pl.cdiv(Tout, bT)
        return pl.pallas_call(
            _copy_kernel,
            out_shape=jax.ShapeDtypeStruct((B, Tout), timestamp.dtype),
            grid=(grid_b, grid_t),
            in_specs=[pl.BlockSpec((bB, bT), lambda i, j: (i, j))],
            out_specs=pl.BlockSpec((bB, bT), lambda i, j: (i, j)),
            compiler_params=pltpu.CompilerParams(
                dimension_semantics=("parallel", "parallel")),
        )(timestamp)

    # Seq axis too narrow to lane-tile: full-seq blocks, grid over batch only.
    return pl.pallas_call(
        _slice_last_kernel,
        out_shape=jax.ShapeDtypeStruct((B, Tout), timestamp.dtype),
        grid=(grid_b,),
        in_specs=[pl.BlockSpec((bB, T), lambda i: (i, 0))],
        out_specs=pl.BlockSpec((bB, Tout), lambda i: (i, 0)),
        compiler_params=pltpu.CompilerParams(
            dimension_semantics=("parallel",)),
    )(timestamp)


def none_time_encoder_forward(inp, timestamp, train=True, output_dim=0):
    """Pallas implementation of NoneTimeEncoder.forward.

    Args:
      inp:        [batch, max_len] (only the shape is used)
      timestamp:  [batch, T] float array
      train:      unused (kept to match the PyTorch signature)
      output_dim: 0 for NoneTimeEncoder

    Returns:
      (time_embedding [batch, max_len, output_dim], timestamp[:, :-1])
    """
    batch_size, max_len = inp.shape
    B, T = timestamp.shape

    # TODO(synk): output_dim == 0 gives a zero-size embedding; Pallas cannot
    # produce zero-size outputs, so it is plain-JAX glue (matches torch.zeros).
    time_embedding = jnp.zeros((batch_size, max_len, output_dim), dtype=jnp.float32)

    if T <= 1:
        # Degenerate case: timestamp[:, :-1] is (B, 0) -> cannot go through
        # pallas_call; produce it directly.
        return time_embedding, jnp.zeros((B, 0), dtype=timestamp.dtype)

    ts_sliced = _slice_timestamp_pallas(timestamp)
    return time_embedding, ts_sliced


if __name__ == "__main__":
    key = jax.random.PRNGKey(0)
    k1, k2, k3 = jax.random.split(key, 3)

    # Primary demo at the module's natural small shapes (narrow-seq path).
    batch, max_len = 2, 8
    inp = jax.random.randint(k1, (batch, max_len), 0, 100, dtype=jnp.int32)
    timestamp = jax.random.uniform(k2, (batch, max_len), dtype=jnp.float32) * 100.0

    time_emb, ts_out = none_time_encoder_forward(inp, timestamp, train=True)
    jax.block_until_ready(time_emb)
    jax.block_until_ready(ts_out)

    assert time_emb.shape == (batch, max_len, 0), time_emb.shape
    ref = timestamp[:, :-1]
    assert ts_out.shape == ref.shape, (ts_out.shape, ref.shape)
    assert bool(jnp.array_equal(ts_out, ref)), "timestamp slice mismatch (small)"

    # Also exercise the tiled (lane-aligned, pipelined) path, including a
    # partial trailing seq tile (255 = 128 + 127).
    batch2, seq2 = 16, 256
    inp2 = jnp.zeros((batch2, seq2), dtype=jnp.int32)
    ts2 = jax.random.uniform(k3, (batch2, seq2), dtype=jnp.float32) * 1e3
    te2, ts2_out = none_time_encoder_forward(inp2, ts2, train=False)
    jax.block_until_ready(ts2_out)
    assert te2.shape == (batch2, seq2, 0), te2.shape
    assert bool(jnp.array_equal(ts2_out, ts2[:, :-1])), "timestamp slice mismatch (tiled)"

    print("KERNEL_OK")
</pallas_src>

<mosaic_0001>
module attributes {stable_mosaic.version = 11 : i64} {
  func.func @_slice_last_kernel(%arg0: i32, %arg1: memref<2x8xf32, #tpu.memory_space<vmem>>, %arg2: memref<2x7xf32, #tpu.memory_space<vmem>>) attributes {dimension_semantics = [#tpu.dimension_semantics<parallel>], iteration_bounds = array<i64: 1>, scalar_prefetch = 0 : i64, scratch_operands = 0 : i64, tpu.core_type = #tpu.core_type<tc>, window_params = [{transform_indices = @transform_0, window_bounds = array<i64: 2, 8>}, {transform_indices = @transform_1, window_bounds = array<i64: 2, 7>}]} {
    %c0 = arith.constant 0 : index
    %c0_0 = arith.constant 0 : index
    %0 = vector.load %arg1[%c0, %c0_0] : memref<2x8xf32, #tpu.memory_space<vmem>>, vector<2x7xf32>
    %c0_1 = arith.constant 0 : index
    %c0_2 = arith.constant 0 : index
    %1 = vector.load %arg2[%c0_1, %c0_2] : memref<2x7xf32, #tpu.memory_space<vmem>>, vector<2x7xf32>
    tpu.vector_store %arg2[%c0_1, %c0_2], %0 {strides = array<i32>} : memref<2x7xf32, #tpu.memory_space<vmem>>, vector<2x7xf32>,
    return
  }
  func.func @transform_0(%arg0: i32) -> (i32, i32) {
    %c0_i32 = arith.constant 0 : i32
    %c0_i32_0 = arith.constant 0 : i32
    return %arg0, %c0_i32 : i32, i32
  }
  func.func @transform_1(%arg0: i32) -> (i32, i32) {
    %c0_i32 = arith.constant 0 : i32
    %c0_i32_0 = arith.constant 0 : i32
    return %arg0, %c0_i32 : i32, i32
  }
}

</mosaic_0001>

<llo_original>
// kernel: tpu_custom_call.1
$region0: #{tpu_custom_call.1}
  #allocation0 [shape = 'u32[]', space=smem, size = 0x4, offset = 0x4, fixed_abs, tag = 'smem constant byte address 0x4 - core index']
  #allocation1 [shape = 'u32[144,128]{1,0:T(1,128)}', space=vmem, size = 0x12000, scoped, tag = 'internal scratch']
  %s0 = inlined_call_operand.hbm [shape: f32[2,8], index: 0, kind: input, shape index: {}]
  %s1 = inlined_call_operand.hbm [shape: f32[2,7], index: 1, kind: output, shape index: {}]
  %s2 = sld [smem:[#allocation0]]
  $region18: #{tpu_custom_call.1} parent=0
    _
  %s4 = ssub.s32 1, %s2
  %s5 = scalar_select 0, %s4, %s2
  $region1: #{tpu_custom_call.1} parent=0
    #allocation2 [shape = 'u8[1024]{0}', space=vmem, size = 0x400, scoped, tag = 'input window, operand 0, single buffered']
    #allocation3 [shape = 's32[1]{0}', space=sflag, size = 0x4, scoped, tag = 'scoped memory for tpu_custom_call.1']
    #allocation4 [shape = 's32[1]{0}', space=sflag, size = 0x4, scoped, tag = 'scoped memory for tpu_custom_call.1']
    #allocation5 [shape = 'u8[1024]{0}', space=vmem, size = 0x400, scoped, tag = 'output window, operand 0, single buffered']
    %6 = vsyncpa [#allocation3], 0
    %7 = vsyncpa [#allocation4], 0
    // Predicated region
    $region2: #{tpu_custom_call.1} parent=1 // pred_check
      _
    $region3: #{tpu_custom_call.1} parent=1 // pred_check_branch
      %9 = sbr.rel (0) target = $region5
    $region4: #{tpu_custom_call.1} parent=1 // pred_region
      %s11 = ssub.s32 32, 32
      %12 = vsyncadd [#allocation3], %s11
      %s14 = sshll.u32 [#allocation2], 4
      %s15 = int_to_ptr.vmem [resolvable:$true] %s14
      %17 = dma.hbm_to_vmem [thread:$0]  %s0, 32, %s15, [#allocation3]
    $region5: #{tpu_custom_call.1} parent=1 // pred_fallthru
      _
    // Predicated region
    $region6: #{tpu_custom_call.1} parent=1 // pred_check
      _
    $region7: #{tpu_custom_call.1} parent=1 // pred_check_branch
      %19 = sbr.rel (0) target = $region9
    $region8: #{tpu_custom_call.1} parent=1 // pred_region
      %20 = dma.done [#allocation3], 32
    $region9: #{tpu_custom_call.1} parent=1 // pred_fallthru
      _
    %v21 = vld [vmem:[#allocation2] sm:$0x3]
    %vm22 = vcmask 50176
    %23 = vst.msk [vmem:[#allocation5] sm:$0x3] %vm22, %v21
    // Predicated region
    $region10: #{tpu_custom_call.1} parent=1 // pred_check
      _
    $region11: #{tpu_custom_call.1} parent=1 // pred_check_branch
      %25 = sbr.rel (0) target = $region13
    $region12: #{tpu_custom_call.1} parent=1 // pred_region
      %s27 = ssub.s32 32, 32
      %28 = vsyncadd [#allocation4], %s27
      %s30 = sshll.u32 [#allocation5], 4
      %s31 = int_to_ptr.vmem [resolvable:$true] %s30
      %33 = dma.vmem_to_hbm [thread:$0]  %s31, 32, %s1, [#allocation4]
    $region13: #{tpu_custom_call.1} parent=1 // pred_fallthru
      _
    // Predicated region
    $region14: #{tpu_custom_call.1} parent=1 // pred_check
      _
    $region15: #{tpu_custom_call.1} parent=1 // pred_check_branch
      %35 = sbr.rel (0) target = $region17
    $region16: #{tpu_custom_call.1} parent=1 // pred_region
      %36 = dma.done [#allocation4], 32
    $region17: #{tpu_custom_call.1} parent=1 // pred_fallthru
      _
    %37 = vsyncpa [#allocation3], 1
    %38 = vsyncpa [#allocation4], 1

</llo_original>
